<compile_context>
chip_gen: v7x
topology: tpu7x:2x2x1
jax: 0.10.0
libtpu: 0.0.40
codegen_flags: <defaults>
</compile_context>

<pallas_src>
import jax
import jax.numpy as jnp
from jax.experimental import pallas as pl
from jax.experimental.pallas import tpu as pltpu

LANES = 128


def _round_up(x, m):
    return (x + m - 1) // m * m


def mmdl_kernel(x0_ref, x1_ref, w0_ref, b0_ref, w1_ref, b1_ref,
                wh_ref, bh_ref, o_ref):
    # In-kernel bf16 cast of activations (avoids a separate XLA cast pass over HBM).
    x0 = x0_ref[...].astype(jnp.bfloat16)
    x1 = x1_ref[...].astype(jnp.bfloat16)

    # Per-modality encoders on the MXU, f32 accumulate; bias + ReLU on the VPU.
    h0 = jnp.dot(x0, w0_ref[...], preferred_element_type=jnp.float32)
    h1 = jnp.dot(x1, w1_ref[...], preferred_element_type=jnp.float32)
    h0 = jnp.maximum(h0 + b0_ref[...], 0.0)
    h1 = jnp.maximum(h1 + b1_ref[...], 0.0)

    # Fusion = concat along features; each half is padded to 64 lanes so the
    # fused hidden is a lane-dense 128-wide operand for the head matmul.
    h = jnp.concatenate([h0, h1], axis=-1).astype(jnp.bfloat16)

    # Both heads fused into one (128, c_pad) matmul; bias add in f32.
    o = jnp.dot(h, wh_ref[...], preferred_element_type=jnp.float32) + bh_ref[...]

    # Single unmasked, lane-dense bf16 store.
    o_ref[...] = o.astype(o_ref.dtype)


def _pack_params(params):
    """Zero-pad encoder hiddens to 64 lanes each and fuse both heads side-by-side."""
    d0, h0dim = params["w0"].shape
    d1, h1dim = params["w1"].shape
    c1 = params["wh1"].shape[-1]
    c2 = params["wh2"].shape[-1]
    assert params["wh1"].shape[0] == h0dim + h1dim, "head1 in_features != H0+H1"
    assert params["wh2"].shape[0] == h0dim + h1dim, "head2 in_features != H0+H1"

    hp0 = _round_up(h0dim, 64)
    hp1 = _round_up(h1dim, 64)
    c_pad = _round_up(c1 + c2, LANES)

    w0 = jnp.zeros((d0, hp0), jnp.float32).at[:, :h0dim].set(params["w0"])
    b0 = jnp.zeros((1, hp0), jnp.float32).at[0, :h0dim].set(params["b0"])
    w1 = jnp.zeros((d1, hp1), jnp.float32).at[:, :h1dim].set(params["w1"])
    b1 = jnp.zeros((1, hp1), jnp.float32).at[0, :h1dim].set(params["b1"])

    # Fused head weight: rows laid out to match [h0 (padded) || h1 (padded)].
    wh = jnp.zeros((hp0 + hp1, c_pad), jnp.float32)
    wh = wh.at[:h0dim, :c1].set(params["wh1"][:h0dim])
    wh = wh.at[hp0:hp0 + h1dim, :c1].set(params["wh1"][h0dim:])
    wh = wh.at[:h0dim, c1:c1 + c2].set(params["wh2"][:h0dim])
    wh = wh.at[hp0:hp0 + h1dim, c1:c1 + c2].set(params["wh2"][h0dim:])
    bh = jnp.zeros((1, c_pad), jnp.float32)
    bh = bh.at[0, :c1].set(params["bh1"])
    bh = bh.at[0, c1:c1 + c2].set(params["bh2"])

    return (w0.astype(jnp.bfloat16), b0, w1.astype(jnp.bfloat16), b1,
            wh.astype(jnp.bfloat16), bh, hp0, hp1, c_pad, c1, c2)


def _pick_tiling(b):
    """Batch tile: large (amortize ~0.35us/step), >=2 steps when possible (v7x 2 TCs)."""
    bp = _round_up(b, 8)
    tb = min(1024, bp)
    if bp // tb < 2 and bp >= 16:
        tb = _round_up((bp + 1) // 2, 8)
    bp = _round_up(bp, tb)
    return tb, bp


def mmdl_forward(inputs, params):
    """Pallas implementation of MMDL.forward (has_padding=False, 2 modalities)."""
    x0, x1 = inputs
    b = x0.shape[0]
    d0, d1 = x0.shape[1], x1.shape[1]

    (w0, b0, w1, b1, wh, bh, hp0, hp1, c_pad, c1, c2) = _pack_params(params)

    tb, bp = _pick_tiling(b)
    if bp != b:  # padded rows produce garbage logits; they are sliced off below
        x0 = jnp.pad(x0, ((0, bp - b), (0, 0)))
        x1 = jnp.pad(x1, ((0, bp - b), (0, 0)))

    grid = (bp // tb,)
    flops = 2 * bp * (d0 * hp0 + d1 * hp1 + (hp0 + hp1) * c_pad)
    bytes_accessed = ((x0.size + x1.size) * 4
                      + (w0.size + w1.size + wh.size) * 2
                      + (b0.size + b1.size + bh.size) * 4
                      + bp * c_pad * 2)

    out = pl.pallas_call(
        mmdl_kernel,
        out_shape=jax.ShapeDtypeStruct((bp, c_pad), jnp.bfloat16),
        grid_spec=pltpu.PrefetchScalarGridSpec(
            num_scalar_prefetch=0,
            grid=grid,
            in_specs=[
                # activations: tiled over batch
                pl.BlockSpec((tb, d0), lambda i: (i, 0)),
                pl.BlockSpec((tb, d1), lambda i: (i, 0)),
                # weights / biases: resident in VMEM across the whole grid
                pl.BlockSpec((d0, hp0), lambda i: (0, 0)),
                pl.BlockSpec((1, hp0), lambda i: (0, 0)),
                pl.BlockSpec((d1, hp1), lambda i: (0, 0)),
                pl.BlockSpec((1, hp1), lambda i: (0, 0)),
                pl.BlockSpec((hp0 + hp1, c_pad), lambda i: (0, 0)),
                pl.BlockSpec((1, c_pad), lambda i: (0, 0)),
            ],
            out_specs=pl.BlockSpec((tb, c_pad), lambda i: (i, 0)),
        ),
        compiler_params=pltpu.CompilerParams(
            dimension_semantics=("parallel",)),
        cost_estimate=pl.CostEstimate(
            flops=flops, transcendentals=0, bytes_accessed=bytes_accessed),
    )(x0, x1, w0, b0, w1, b1, wh, bh)

    out = out[:b]                               # drop batch padding
    return (out[:, :c1].astype(jnp.float32),    # head1 logits
            out[:, c1:c1 + c2].astype(jnp.float32))  # head2 logits


def mmdl_reference(inputs, params):
    """Pure-JAX f32 reference mirroring the PyTorch module structure exactly."""
    x0, x1 = inputs
    h0 = jnp.maximum(x0 @ params["w0"] + params["b0"], 0.0)
    h1 = jnp.maximum(x1 @ params["w1"] + params["b1"], 0.0)
    fused = jnp.concatenate([h0, h1], axis=-1)
    return fused @ params["wh1"] + params["bh1"], fused @ params["wh2"] + params["bh2"]


def init_params(key, d0, d1, hidden, c1, c2):
    ks = jax.random.split(key, 8)
    scale = 0.1
    return {
        "w0": scale * jax.random.normal(ks[0], (d0, hidden), jnp.float32),
        "b0": scale * jax.random.normal(ks[1], (hidden,), jnp.float32),
        "w1": scale * jax.random.normal(ks[2], (d1, hidden), jnp.float32),
        "b1": scale * jax.random.normal(ks[3], (hidden,), jnp.float32),
        "wh1": scale * jax.random.normal(ks[4], (2 * hidden, c1), jnp.float32),
        "bh1": scale * jax.random.normal(ks[5], (c1,), jnp.float32),
        "wh2": scale * jax.random.normal(ks[6], (2 * hidden, c2), jnp.float32),
        "bh2": scale * jax.random.normal(ks[7], (c2,), jnp.float32),
    }


if __name__ == "__main__":
    B, D0, D1, H, C1, C2 = 8, 16, 32, 32, 5, 3

    key = jax.random.PRNGKey(0)
    kx0, kx1, kp = jax.random.split(key, 3)
    x0 = jax.random.normal(kx0, (B, D0), jnp.float32)
    x1 = jax.random.normal(kx1, (B, D1), jnp.float32)
    params = init_params(kp, D0, D1, H, C1, C2)

    out1, out2 = mmdl_forward((x0, x1), params)
    jax.block_until_ready((out1, out2))

    ref1, ref2 = mmdl_reference((x0, x1), params)
    assert out1.shape == (B, C1) and out2.shape == (B, C2)
    # bf16 matmul operands + bf16 output -> compare against f32 reference with bf16 tolerance
    assert jnp.allclose(out1, ref1, atol=5e-2, rtol=5e-2)
    assert jnp.allclose(out2, ref2, atol=5e-2, rtol=5e-2)

    print("KERNEL_OK")
</pallas_src>

<mosaic_0001>
module attributes {stable_mosaic.version = 11 : i64} {
  func.func @mmdl_kernel(%arg0: i32, %arg1: memref<8x16xf32, #tpu.memory_space<vmem>>, %arg2: memref<8x32xf32, #tpu.memory_space<vmem>>, %arg3: memref<16x64xbf16, #tpu.memory_space<vmem>>, %arg4: memref<1x64xf32, #tpu.memory_space<vmem>>, %arg5: memref<32x64xbf16, #tpu.memory_space<vmem>>, %arg6: memref<1x64xf32, #tpu.memory_space<vmem>>, %arg7: memref<128x128xbf16, #tpu.memory_space<vmem>>, %arg8: memref<1x128xf32, #tpu.memory_space<vmem>>, %arg9: memref<8x128xbf16, #tpu.memory_space<vmem>>) attributes {dimension_semantics = [#tpu.dimension_semantics<parallel>], iteration_bounds = array<i64: 1>, scalar_prefetch = 0 : i64, scratch_operands = 0 : i64, tpu.core_type = #tpu.core_type<tc>, window_params = [{transform_indices = @transform_0, window_bounds = array<i64: 8, 16>}, {transform_indices = @transform_1, window_bounds = array<i64: 8, 32>}, {pipeline_mode = #tpu.pipeline_mode<synchronous>, transform_indices = @transform_2, window_bounds = array<i64: 16, 64>}, {pipeline_mode = #tpu.pipeline_mode<synchronous>, transform_indices = @transform_3, window_bounds = array<i64: 1, 64>}, {pipeline_mode = #tpu.pipeline_mode<synchronous>, transform_indices = @transform_4, window_bounds = array<i64: 32, 64>}, {pipeline_mode = #tpu.pipeline_mode<synchronous>, transform_indices = @transform_5, window_bounds = array<i64: 1, 64>}, {pipeline_mode = #tpu.pipeline_mode<synchronous>, transform_indices = @transform_6, window_bounds = array<i64: 128, 128>}, {pipeline_mode = #tpu.pipeline_mode<synchronous>, transform_indices = @transform_7, window_bounds = array<i64: 1, 128>}, {transform_indices = @transform_8, window_bounds = array<i64: 8, 128>}]} {
    %c0 = arith.constant 0 : index
    %c0_0 = arith.constant 0 : index
    %0 = vector.load %arg1[%c0, %c0_0] : memref<8x16xf32, #tpu.memory_space<vmem>>, vector<8x16xf32>
    %1 = arith.truncf %0 : vector<8x16xf32> to vector<8x16xbf16>
    %c0_1 = arith.constant 0 : index
    %c0_2 = arith.constant 0 : index
    %2 = vector.load %arg2[%c0_1, %c0_2] : memref<8x32xf32, #tpu.memory_space<vmem>>, vector<8x32xf32>
    %3 = arith.truncf %2 : vector<8x32xf32> to vector<8x32xbf16>
    %c0_3 = arith.constant 0 : index
    %c0_4 = arith.constant 0 : index
    %4 = vector.load %arg3[%c0_3, %c0_4] : memref<16x64xbf16, #tpu.memory_space<vmem>>, vector<16x64xbf16>
    %cst = arith.constant dense<0.000000e+00> : vector<8x64xf32>
    %5 = tpu.matmul %1, %4, %cst {dimension_numbers = #tpu.dot_dimension_numbers<[1], [0], [0], [1], [0, 0, 1, 1], [], []>} : vector<8x16xbf16>, vector<16x64xbf16>, vector<8x64xf32> -> vector<8x64xf32>
    %c0_5 = arith.constant 0 : index
    %c0_6 = arith.constant 0 : index
    %6 = vector.load %arg5[%c0_5, %c0_6] : memref<32x64xbf16, #tpu.memory_space<vmem>>, vector<32x64xbf16>
    %cst_7 = arith.constant dense<0.000000e+00> : vector<8x64xf32>
    %7 = tpu.matmul %3, %6, %cst_7 {dimension_numbers = #tpu.dot_dimension_numbers<[1], [0], [0], [1], [0, 0, 1, 1], [], []>} : vector<8x32xbf16>, vector<32x64xbf16>, vector<8x64xf32> -> vector<8x64xf32>
    %c0_8 = arith.constant 0 : index
    %c0_9 = arith.constant 0 : index
    %8 = vector.load %arg4[%c0_8, %c0_9] : memref<1x64xf32, #tpu.memory_space<vmem>>, vector<1x64xf32>
    %9 = vector.broadcast %8 : vector<1x64xf32> to vector<8x64xf32>
    %10 = arith.addf %5, %9 : vector<8x64xf32>
    %cst_10 = arith.constant 0.000000e+00 : f32
    %11 = vector.broadcast %cst_10 : f32 to vector<8x64xf32>
    %12 = arith.maximumf %10, %11 : vector<8x64xf32>
    %c0_11 = arith.constant 0 : index
    %c0_12 = arith.constant 0 : index
    %13 = vector.load %arg6[%c0_11, %c0_12] : memref<1x64xf32, #tpu.memory_space<vmem>>, vector<1x64xf32>
    %14 = vector.broadcast %13 : vector<1x64xf32> to vector<8x64xf32>
    %15 = arith.addf %7, %14 : vector<8x64xf32>
    %cst_13 = arith.constant 0.000000e+00 : f32
    %16 = vector.broadcast %cst_13 : f32 to vector<8x64xf32>
    %17 = arith.maximumf %15, %16 : vector<8x64xf32>
    %18 = tpu.concatenate %12, %17 in 1 : vector<8x64xf32>, vector<8x64xf32> -> vector<8x128xf32>
    %19 = arith.truncf %18 : vector<8x128xf32> to vector<8x128xbf16>
    %c0_14 = arith.constant 0 : index
    %c0_15 = arith.constant 0 : index
    %20 = vector.load %arg7[%c0_14, %c0_15] : memref<128x128xbf16, #tpu.memory_space<vmem>>, vector<128x128xbf16>
    %cst_16 = arith.constant dense<0.000000e+00> : vector<8x128xf32>
    %21 = tpu.matmul %19, %20, %cst_16 {dimension_numbers = #tpu.dot_dimension_numbers<[1], [0], [0], [1], [0, 0, 1, 1], [], []>} : vector<8x128xbf16>, vector<128x128xbf16>, vector<8x128xf32> -> vector<8x128xf32>
    %c0_17 = arith.constant 0 : index
    %c0_18 = arith.constant 0 : index
    %22 = vector.load %arg8[%c0_17, %c0_18] : memref<1x128xf32, #tpu.memory_space<vmem>>, vector<1x128xf32>
    %23 = vector.broadcast %22 : vector<1x128xf32> to vector<8x128xf32>
    %24 = arith.addf %21, %23 : vector<8x128xf32>
    %25 = arith.truncf %24 : vector<8x128xf32> to vector<8x128xbf16>
    %c0_19 = arith.constant 0 : index
    %c0_20 = arith.constant 0 : index
    %26 = vector.load %arg9[%c0_19, %c0_20] : memref<8x128xbf16, #tpu.memory_space<vmem>>, vector<8x128xbf16>
    tpu.vector_store %arg9[%c0_19, %c0_20], %25 {strides = array<i32>} : memref<8x128xbf16, #tpu.memory_space<vmem>>, vector<8x128xbf16>,
    return
  }
  func.func @transform_0(%arg0: i32) -> (i32, i32) {
    %c0_i32 = arith.constant 0 : i32
    %c0_i32_0 = arith.constant 0 : i32
    return %arg0, %c0_i32 : i32, i32
  }
  func.func @transform_1(%arg0: i32) -> (i32, i32) {
    %c0_i32 = arith.constant 0 : i32
    %c0_i32_0 = arith.constant 0 : i32
    return %arg0, %c0_i32 : i32, i32
  }
  func.func @transform_2(%arg0: i32) -> (i32, i32) {
    %c0_i32 = arith.constant 0 : i32
    %c0_i32_0 = arith.constant 0 : i32
    %c0_i32_1 = arith.constant 0 : i32
    return %c0_i32, %c0_i32_0 : i32, i32
  }
  func.func @transform_3(%arg0: i32) -> (i32, i32) {
    %c0_i32 = arith.constant 0 : i32
    %c0_i32_0 = arith.constant 0 : i32
    %c0_i32_1 = arith.constant 0 : i32
    return %c0_i32, %c0_i32_0 : i32, i32
  }
  func.func @transform_4(%arg0: i32) -> (i32, i32) {
    %c0_i32 = arith.constant 0 : i32
    %c0_i32_0 = arith.constant 0 : i32
    %c0_i32_1 = arith.constant 0 : i32
    return %c0_i32, %c0_i32_0 : i32, i32
  }
  func.func @transform_5(%arg0: i32) -> (i32, i32) {
    %c0_i32 = arith.constant 0 : i32
    %c0_i32_0 = arith.constant 0 : i32
    %c0_i32_1 = arith.constant 0 : i32
    return %c0_i32, %c0_i32_0 : i32, i32
  }
  func.func @transform_6(%arg0: i32) -> (i32, i32) {
    %c0_i32 = arith.constant 0 : i32
    %c0_i32_0 = arith.constant 0 : i32
    %c0_i32_1 = arith.constant 0 : i32
    return %c0_i32, %c0_i32_0 : i32, i32
  }
  func.func @transform_7(%arg0: i32) -> (i32, i32) {
    %c0_i32 = arith.constant 0 : i32
    %c0_i32_0 = arith.constant 0 : i32
    %c0_i32_1 = arith.constant 0 : i32
    return %c0_i32, %c0_i32_0 : i32, i32
  }
  func.func @transform_8(%arg0: i32) -> (i32, i32) {
    %c0_i32 = arith.constant 0 : i32
    %c0_i32_0 = arith.constant 0 : i32
    return %arg0, %c0_i32 : i32, i32
  }
}

</mosaic_0001>

<llo_original>
// kernel: tpu_custom_call.1
$region0: #{tpu_custom_call.1}
  #allocation0 [shape = 'u32[]', space=smem, size = 0x4, offset = 0x4, fixed_abs, tag = 'smem constant byte address 0x4 - core index']
  #allocation1 [shape = 'u32[144,128]{1,0:T(1,128)}', space=vmem, size = 0x12000, scoped, tag = 'internal scratch']
  %s0 = inlined_call_operand.hbm [shape: f32[8,16], index: 0, kind: input, shape index: {}]
  %s1 = inlined_call_operand.hbm [shape: f32[8,32], index: 1, kind: input, shape index: {}]
  %s2 = inlined_call_operand.hbm [shape: bf16[16,64], index: 2, kind: input, shape index: {}]
  %s3 = inlined_call_operand.vmem [shape: f32[1,64], index: 3, kind: input, shape index: {}]
  %s4 = inlined_call_operand.hbm [shape: bf16[32,64], index: 4, kind: input, shape index: {}]
  %s5 = inlined_call_operand.vmem [shape: f32[1,64], index: 5, kind: input, shape index: {}]
  %s6 = inlined_call_operand.hbm [shape: bf16[128,128], index: 6, kind: input, shape index: {}]
  %s7 = inlined_call_operand.vmem [shape: f32[1,128], index: 7, kind: input, shape index: {}]
  %s8 = inlined_call_operand.hbm [shape: bf16[8,128], index: 8, kind: output, shape index: {}]
  %s9 = sld [smem:[#allocation0]]
  $region62: #{tpu_custom_call.1} parent=0
    _
  %s11 = ssub.s32 1, %s9
  %s12 = scalar_select 0, %s11, %s9
  $region1: #{tpu_custom_call.1} parent=0
    #allocation2 [shape = 'u8[4096]{0}', space=vmem, size = 0x1000, scoped, tag = 'input window, operand 0, single buffered']
    #allocation3 [shape = 's32[1]{0}', space=sflag, size = 0x4, scoped, tag = 'scoped memory for tpu_custom_call.1']
    #allocation4 [shape = 's32[1]{0}', space=sflag, size = 0x4, scoped, tag = 'scoped memory for tpu_custom_call.1']
    #allocation5 [shape = 'u8[4096]{0}', space=vmem, size = 0x1000, scoped, tag = 'input window, operand 1, single buffered']
    #allocation6 [shape = 's32[1]{0}', space=sflag, size = 0x4, scoped, tag = 'scoped memory for tpu_custom_call.1']
    #allocation7 [shape = 'u8[4096]{0}', space=vmem, size = 0x1000, scoped, tag = 'input window, operand 2, single buffered']
    #allocation8 [shape = 'u8[8192]{0}', space=vmem, size = 0x2000, scoped, tag = 'input window, operand 4, single buffered']
    #allocation9 [shape = 's32[1]{0}', space=sflag, size = 0x4, scoped, tag = 'scoped memory for tpu_custom_call.1']
    #allocation10 [shape = 'u8[32768]{0}', space=vmem, size = 0x8000, scoped, tag = 'input window, operand 6, single buffered']
    #allocation11 [shape = 'u8[2048]{0}', space=vmem, size = 0x800, scoped, tag = 'output window, operand 0, single buffered']
    %13 = vsyncpa [#allocation3], 0
    %14 = vsyncpa [#allocation6], 0
    %15 = vsyncpa [#allocation9], 0
    %16 = vsyncpa [#allocation4], 0
    // Predicated region
    $region2: #{tpu_custom_call.1} parent=1 // pred_check
      _
    $region3: #{tpu_custom_call.1} parent=1 // pred_check_branch
      %18 = sbr.rel (0) target = $region5
    $region4: #{tpu_custom_call.1} parent=1 // pred_region
      %s20 = ssub.s32 128, 128
      %21 = vsyncadd [#allocation3], %s20
      %s23 = sshll.u32 [#allocation2], 4
      %s24 = int_to_ptr.vmem [resolvable:$true] %s23
      %26 = dma.hbm_to_vmem [thread:$0]  %s0, 128, %s24, [#allocation3]
    $region5: #{tpu_custom_call.1} parent=1 // pred_fallthru
      _
    // Predicated region
    $region6: #{tpu_custom_call.1} parent=1 // pred_check
      _
    $region7: #{tpu_custom_call.1} parent=1 // pred_check_branch
      %28 = sbr.rel (0) target = $region9
    $region8: #{tpu_custom_call.1} parent=1 // pred_region
      %s30 = ssub.s32 128, 128
      %31 = vsyncadd [#allocation6], %s30
      %s33 = sshll.u32 [#allocation5], 4
      %s34 = int_to_ptr.vmem [resolvable:$true] %s33
      %36 = dma.hbm_to_vmem [thread:$0]  %s1, 128, %s34, [#allocation6]
    $region9: #{tpu_custom_call.1} parent=1 // pred_fallthru
      _
    // Predicated region
    $region10: #{tpu_custom_call.1} parent=1 // pred_check
      _
    $region11: #{tpu_custom_call.1} parent=1 // pred_check_branch
      %38 = sbr.rel (0) target = $region13
    $region12: #{tpu_custom_call.1} parent=1 // pred_region
      %s40 = ssub.s32 128, 128
      %41 = vsyncadd [#allocation6], %s40
      %s42 = sshll.u32 [#allocation7], 4
      %s43 = int_to_ptr.vmem [resolvable:$true] %s42
      %48 = dma.hbm_to_vmem [thread:$0]  %s2, 128, %s43, [#allocation6], 64, 64, 4
    $region13: #{tpu_custom_call.1} parent=1 // pred_fallthru
      _
    // Predicated region
    $region14: #{tpu_custom_call.1} parent=1 // pred_check
      _
    $region15: #{tpu_custom_call.1} parent=1 // pred_check_branch
      %50 = sbr.rel (0) target = $region17
    $region16: #{tpu_custom_call.1} parent=1 // pred_region
      _
    $region17: #{tpu_custom_call.1} parent=1 // pred_fallthru
      _
    // Predicated region
    $region18: #{tpu_custom_call.1} parent=1 // pred_check
      _
    $region19: #{tpu_custom_call.1} parent=1 // pred_check_branch
      %52 = sbr.rel (0) target = $region21
    $region20: #{tpu_custom_call.1} parent=1 // pred_region
      %s54 = ssub.s32 256, 256
      %55 = vsyncadd [#allocation9], %s54
      %s56 = sshll.u32 [#allocation8], 4
      %s57 = int_to_ptr.vmem [resolvable:$true] %s56
      %62 = dma.hbm_to_vmem [thread:$0]  %s4, 256, %s57, [#allocation9], 64, 64, 4
    $region21: #{tpu_custom_call.1} parent=1 // pred_fallthru
      _
    // Predicated region
    $region22: #{tpu_custom_call.1} parent=1 // pred_check
      _
    $region23: #{tpu_custom_call.1} parent=1 // pred_check_branch
      %64 = sbr.rel (0) target = $region25
    $region24: #{tpu_custom_call.1} parent=1 // pred_region
      _
    $region25: #{tpu_custom_call.1} parent=1 // pred_fallthru
      _
    // Predicated region
    $region26: #{tpu_custom_call.1} parent=1 // pred_check
      _
    $region27: #{tpu_custom_call.1} parent=1 // pred_check_branch
      %66 = sbr.rel (0) target = $region29
    $region28: #{tpu_custom_call.1} parent=1 // pred_region
      %s68 = ssub.s32 1024, 1024
      %69 = vsyncadd [#allocation9], %s68
      %s70 = sshll.u32 [#allocation10], 4
      %s71 = int_to_ptr.vmem [resolvable:$true] %s70
      %76 = dma.hbm_to_vmem [thread:$0]  %s6, 1024, %s71, [#allocation9], 64, 64, 4
    $region29: #{tpu_custom_call.1} parent=1 // pred_fallthru
      _
    // Predicated region
    $region30: #{tpu_custom_call.1} parent=1 // pred_check
      _
    $region31: #{tpu_custom_call.1} parent=1 // pred_check_branch
      %78 = sbr.rel (0) target = $region33
    $region32: #{tpu_custom_call.1} parent=1 // pred_region
      _
    $region33: #{tpu_custom_call.1} parent=1 // pred_fallthru
      _
    // Predicated region
    $region34: #{tpu_custom_call.1} parent=1 // pred_check
      _
    $region35: #{tpu_custom_call.1} parent=1 // pred_check_branch
      %80 = sbr.rel (0) target = $region37
    $region36: #{tpu_custom_call.1} parent=1 // pred_region
      %81 = dma.done [#allocation3], 128
    $region37: #{tpu_custom_call.1} parent=1 // pred_fallthru
      _
    // Predicated region
    $region38: #{tpu_custom_call.1} parent=1 // pred_check
      _
    $region39: #{tpu_custom_call.1} parent=1 // pred_check_branch
      %83 = sbr.rel (0) target = $region41
    $region40: #{tpu_custom_call.1} parent=1 // pred_region
      %84 = dma.done [#allocation6], 128
    $region41: #{tpu_custom_call.1} parent=1 // pred_fallthru
      _
    // Predicated region
    $region42: #{tpu_custom_call.1} parent=1 // pred_check
      _
    $region43: #{tpu_custom_call.1} parent=1 // pred_check_branch
      %86 = sbr.rel (0) target = $region45
    $region44: #{tpu_custom_call.1} parent=1 // pred_region
      %87 = dma.done [#allocation6], 128
    $region45: #{tpu_custom_call.1} parent=1 // pred_fallthru
      _
    // Predicated region
    $region46: #{tpu_custom_call.1} parent=1 // pred_check
      _
    $region47: #{tpu_custom_call.1} parent=1 // pred_check_branch
      %89 = sbr.rel (0) target = $region49
    $region48: #{tpu_custom_call.1} parent=1 // pred_region
      %90 = dma.done [#allocation9], 256
    $region49: #{tpu_custom_call.1} parent=1 // pred_fallthru
      _
    // Predicated region
    $region50: #{tpu_custom_call.1} parent=1 // pred_check
      _
    $region51: #{tpu_custom_call.1} parent=1 // pred_check_branch
      %92 = sbr.rel (0) target = $region53
    $region52: #{tpu_custom_call.1} parent=1 // pred_region
      %93 = dma.done [#allocation9], 1024
    $region53: #{tpu_custom_call.1} parent=1 // pred_fallthru
      _
    %v95 = vld [vmem:[#allocation2] sm:$0xff]
    %v96 = vpack.c.bf16 %v95, %v95
    %v97 = vld [vmem:[#allocation5] sm:$0xff]
    %v98 = vpack.c.bf16 %v97, %v97
    %v99 = vld [vmem:[#allocation7] sm:$0xf]
    %v100 = vld [vmem:[#allocation7 + $0x4] sm:$0xf]
    %v101 = vld [vmem:[#allocation8] sm:$0xf]
    %v102 = vld [vmem:[#allocation8 + $0x4] sm:$0xf]
    %v103 = vld [vmem:[#allocation8 + $0x8] sm:$0xf]
    %v104 = vld [vmem:[#allocation8 + $0xc] sm:$0xf]
    %v105 = vld [vmem:[%s3] sm:$0x1]
    %v107 = vlaneseq
    %v108 = vshrl.u32 %v107, 7
    %v109 = vsub.s32 0, %v108
    %v110 = vrot.slane %v105, %v109
    %v114 = vunpack.c.l.b16 %v99
    %v115 = vunpack.c.l.b16 %v100
    %v116 = vpack.c.b16 %v115, %v114
    %vm118 = vcmask 130048
    %v120 = vsel %vm118, %v96, 0
    %122 = vmatprep.subr.bf16.mxu0 0
    %123 = vmatpush1.bf16.msra.mxu0 %v116
    %124 = vmatprep.subr.bf16.mxu0 0
    %125 = vmatpush1.bf16.msra.mxu0 0
    %126 = vmatprep.subr.bf16.mxu0 0
    %127 = vmatpush1.bf16.msra.mxu0 0
    %128 = vmatprep.subr.bf16.mxu0 0
    %129 = vmatpush1.bf16.msra.mxu0 0
    %130 = vmatprep.subr.bf16.mxu0 0
    %131 = vmatpush1.bf16.msra.mxu0 0
    %132 = vmatprep.subr.bf16.mxu0 0
    %133 = vmatpush1.bf16.msra.mxu0 0
    %134 = vmatprep.subr.bf16.mxu0 0
    %135 = vmatpush1.bf16.msra.mxu0 0
    %136 = vmatprep.subr.bf16.mxu0 0
    %137 = vmatpush1.bf16.msra.mxu0 0
    %138 = vmatprep.subr.bf16.mxu0 0
    %139 = vmatpush1.bf16.msra.mxu0 0
    %140 = vmatprep.subr.bf16.mxu0 0
    %141 = vmatpush1.bf16.msra.mxu0 0
    %142 = vmatprep.subr.bf16.mxu0 0
    %143 = vmatpush1.bf16.msra.mxu0 0
    %144 = vmatprep.subr.bf16.mxu0 0
    %145 = vmatpush1.bf16.msra.mxu0 0
    %146 = vmatprep.subr.bf16.mxu0 0
    %147 = vmatpush1.bf16.msra.mxu0 0
    %148 = vmatprep.subr.bf16.mxu0 0
    %149 = vmatpush1.bf16.msra.mxu0 0
    %150 = vmatprep.subr.bf16.mxu0 0
    %151 = vmatpush1.bf16.msra.mxu0 0
    %152 = vmatprep.subr.bf16.mxu0 0
    %153 = vmatpush1.bf16.msra.mxu0 0
    %154 = vmatprep.mubr.bf16.mxu0 0
    %155 = vmatmul.mubr.bf16.gmra.mrb[0].mxu0 %v120
    %v156 = vpop.f32.mrb[0].mxu0
    %v157 = vadd.f32 %v110, %v156
    %v158 = vpop.f32.mrb[0].mxu0
    %v159 = vpop.f32.mrb[0].mxu0
    %v160 = vpop.f32.mrb[0].mxu0
    %161 = vdwg.mxu0
    %v162 = vmax.f32 %v157, 0.0
    %v163 = vld [vmem:[%s5] sm:$0x1]
    %v165 = vlaneseq
    %v166 = vshrl.u32 %v165, 7
    %v167 = vsub.s32 0, %v166
    %v168 = vrot.slane %v163, %v167
    %v174 = vunpack.c.l.b16 %v101
    %v175 = vunpack.c.l.b16 %v102
    %v176 = vunpack.c.l.b16 %v103
    %v177 = vunpack.c.l.b16 %v104
    %v178 = vpack.c.b16 %v175, %v174
    %v179 = vpack.c.b16 %v177, %v176
    %vm182 = vcmask 261120
    %v184 = vsel %vm182, %v98, 0
    %186 = vmatprep.subr.bf16.mxu0 0
    %187 = vmatpush1.bf16.msra.mxu0 %v178
    %188 = vmatprep.subr.bf16.mxu0 0
    %189 = vmatpush1.bf16.msra.mxu0 %v179
    %190 = vmatprep.subr.bf16.mxu0 0
    %191 = vmatpush1.bf16.msra.mxu0 0
    %192 = vmatprep.subr.bf16.mxu0 0
    %193 = vmatpush1.bf16.msra.mxu0 0
    %194 = vmatprep.subr.bf16.mxu0 0
    %195 = vmatpush1.bf16.msra.mxu0 0
    %196 = vmatprep.subr.bf16.mxu0 0
    %197 = vmatpush1.bf16.msra.mxu0 0
    %198 = vmatprep.subr.bf16.mxu0 0
    %199 = vmatpush1.bf16.msra.mxu0 0
    %200 = vmatprep.subr.bf16.mxu0 0
    %201 = vmatpush1.bf16.msra.mxu0 0
    %202 = vmatprep.subr.bf16.mxu0 0
    %203 = vmatpush1.bf16.msra.mxu0 0
    %204 = vmatprep.subr.bf16.mxu0 0
    %205 = vmatpush1.bf16.msra.mxu0 0
    %206 = vmatprep.subr.bf16.mxu0 0
    %207 = vmatpush1.bf16.msra.mxu0 0
    %208 = vmatprep.subr.bf16.mxu0 0
    %209 = vmatpush1.bf16.msra.mxu0 0
    %210 = vmatprep.subr.bf16.mxu0 0
    %211 = vmatpush1.bf16.msra.mxu0 0
    %212 = vmatprep.subr.bf16.mxu0 0
    %213 = vmatpush1.bf16.msra.mxu0 0
    %214 = vmatprep.subr.bf16.mxu0 0
    %215 = vmatpush1.bf16.msra.mxu0 0
    %216 = vmatprep.subr.bf16.mxu0 0
    %217 = vmatpush1.bf16.msra.mxu0 0
    %218 = vmatprep.mubr.bf16.mxu0 0
    %219 = vmatmul.mubr.bf16.gmra.mrb[0].mxu0 %v184
    %v220 = vpop.f32.mrb[0].mxu0
    %v221 = vadd.f32 %v168, %v220
    %v222 = vpop.f32.mrb[0].mxu0
    %v223 = vpop.f32.mrb[0].mxu0
    %v224 = vpop.f32.mrb[0].mxu0
    %225 = vdwg.mxu0
    %v226 = vmax.f32 %v221, 0.0
    %228 = vrot.lane.b32.xlu0 %v226, 64
    %v229 = vpop.permute.xlu0 %228
    %vm231 = vcmask 523264
    %v232 = vsel %vm231, %v162, %v229
    %v233 = vpack.c.bf16 %v232, %v232
    %v234 = vld [vmem:[#allocation10] sm:$0xf]
    %v235 = vld [vmem:[#allocation10 + $0x4] sm:$0xf]
    %v236 = vld [vmem:[#allocation10 + $0x8] sm:$0xf]
    %v237 = vld [vmem:[#allocation10 + $0xc] sm:$0xf]
    %v238 = vld [vmem:[#allocation10 + $0x10] sm:$0xf]
    %v239 = vld [vmem:[#allocation10 + $0x14] sm:$0xf]
    %v240 = vld [vmem:[#allocation10 + $0x18] sm:$0xf]
    %v241 = vld [vmem:[#allocation10 + $0x1c] sm:$0xf]
    %v242 = vld [vmem:[#allocation10 + $0x20] sm:$0xf]
    %v243 = vld [vmem:[#allocation10 + $0x24] sm:$0xf]
    %v244 = vld [vmem:[#allocation10 + $0x28] sm:$0xf]
    %v245 = vld [vmem:[#allocation10 + $0x2c] sm:$0xf]
    %v246 = vld [vmem:[#allocation10 + $0x30] sm:$0xf]
    %v247 = vld [vmem:[#allocation10 + $0x34] sm:$0xf]
    %v248 = vld [vmem:[#allocation10 + $0x38] sm:$0xf]
    %v249 = vld [vmem:[#allocation10 + $0x3c] sm:$0xf]
    %v250 = vld [vmem:[%s7] sm:$0x1]
    %v252 = vlaneseq
    %v253 = vshrl.u32 %v252, 7
    %v254 = vsub.s32 0, %v253
    %v255 = vrot.slane %v250, %v254
    %v273 = vunpack.c.l.b16 %v234
    %v274 = vunpack.c.l.b16 %v235
    %v275 = vunpack.c.l.b16 %v236
    %v276 = vunpack.c.l.b16 %v237
    %v277 = vunpack.c.l.b16 %v238
    %v278 = vunpack.c.l.b16 %v239
    %v279 = vunpack.c.l.b16 %v240
    %v280 = vunpack.c.l.b16 %v241
    %v281 = vunpack.c.l.b16 %v242
    %v282 = vunpack.c.l.b16 %v243
    %v283 = vunpack.c.l.b16 %v244
    %v284 = vunpack.c.l.b16 %v245
    %v285 = vunpack.c.l.b16 %v246
    %v286 = vunpack.c.l.b16 %v247
    %v287 = vunpack.c.l.b16 %v248
    %v288 = vunpack.c.l.b16 %v249
    %v289 = vpack.c.b16 %v274, %v273
    %v290 = vpack.c.b16 %v276, %v275
    %v291 = vpack.c.b16 %v278, %v277
    %v292 = vpack.c.b16 %v280, %v279
    %v293 = vpack.c.b16 %v282, %v281
    %v294 = vpack.c.b16 %v284, %v283
    %v295 = vpack.c.b16 %v286, %v285
    %v296 = vpack.c.b16 %v288, %v287
    %305 = vmatprep.subr.bf16.mxu0 0
    %306 = vmatpush1.bf16.msra.mxu0 %v289
    %307 = vmatprep.subr.bf16.mxu0 0
    %308 = vmatpush1.bf16.msra.mxu0 %v290
    %309 = vmatprep.subr.bf16.mxu0 0
    %310 = vmatpush1.bf16.msra.mxu0 %v291
    %311 = vmatprep.subr.bf16.mxu0 0
    %312 = vmatpush1.bf16.msra.mxu0 %v292
    %313 = vmatprep.subr.bf16.mxu0 0
    %314 = vmatpush1.bf16.msra.mxu0 %v293
    %315 = vmatprep.subr.bf16.mxu0 0
    %316 = vmatpush1.bf16.msra.mxu0 %v294
    %317 = vmatprep.subr.bf16.mxu0 0
    %318 = vmatpush1.bf16.msra.mxu0 %v295
    %319 = vmatprep.subr.bf16.mxu0 0
    %320 = vmatpush1.bf16.msra.mxu0 %v296
    %321 = vmatprep.subr.bf16.mxu0 0
    %322 = vmatpush1.bf16.msra.mxu0 0
    %323 = vmatprep.subr.bf16.mxu0 0
    %324 = vmatpush1.bf16.msra.mxu0 0
    %325 = vmatprep.subr.bf16.mxu0 0
    %326 = vmatpush1.bf16.msra.mxu0 0
    %327 = vmatprep.subr.bf16.mxu0 0
    %328 = vmatpush1.bf16.msra.mxu0 0
    %329 = vmatprep.subr.bf16.mxu0 0
    %330 = vmatpush1.bf16.msra.mxu0 0
    %331 = vmatprep.subr.bf16.mxu0 0
    %332 = vmatpush1.bf16.msra.mxu0 0
    %333 = vmatprep.subr.bf16.mxu0 0
    %334 = vmatpush1.bf16.msra.mxu0 0
    %335 = vmatprep.subr.bf16.mxu0 0
    %336 = vmatpush1.bf16.msra.mxu0 0
    %337 = vmatprep.mubr.bf16.mxu0 0
    %338 = vmatmul.mubr.bf16.gmra.mrb[0].mxu0 %v233
    %v339 = vpop.f32.mrb[0].mxu0
    %v340 = vadd.f32 %v255, %v339
    %v341 = vpop.f32.mrb[0].mxu0
    %v342 = vpop.f32.mrb[0].mxu0
    %v343 = vpop.f32.mrb[0].mxu0
    %344 = vdwg.mxu0
    %v345 = vpack.c.bf16 %v340, %v340
    %346 = vst [vmem:[#allocation11] sm:$0xf] %v345
    // Predicated region
    $region54: #{tpu_custom_call.1} parent=1 // pred_check
      _
    $region55: #{tpu_custom_call.1} parent=1 // pred_check_branch
      %348 = sbr.rel (0) target = $region57
    $region56: #{tpu_custom_call.1} parent=1 // pred_region
      %s350 = ssub.s32 64, 64
      %351 = vsyncadd [#allocation4], %s350
      %s353 = sshll.u32 [#allocation11], 4
      %s354 = int_to_ptr.vmem [resolvable:$true] %s353
      %356 = dma.vmem_to_hbm [thread:$0]  %s354, 64, %s8, [#allocation4]
    $region57: #{tpu_custom_call.1} parent=1 // pred_fallthru
      _
    // Predicated region
    $region58: #{tpu_custom_call.1} parent=1 // pred_check
      _
    $region59: #{tpu_custom_call.1} parent=1 // pred_check_branch
      %358 = sbr.rel (0) target = $region61
    $region60: #{tpu_custom_call.1} parent=1 // pred_region
      %359 = dma.done [#allocation4], 64
    $region61: #{tpu_custom_call.1} parent=1 // pred_fallthru
      _
    %360 = vsyncpa [#allocation3], 1
    %361 = vsyncpa [#allocation6], 1
    %362 = vsyncpa [#allocation9], 1
    %363 = vsyncpa [#allocation4], 1

</llo_original>
